<compile_context>
chip_gen: v5e
topology: v5e:2x2
jax: 0.10.0
libtpu: 0.0.40
codegen_flags: <defaults>
</compile_context>

<pallas_src>
import jax
import jax.numpy as jnp
from jax.experimental import pallas as pl
from jax.experimental.pallas import tpu as pltpu

# ---------------- Config (small, consistent with the module defaults) --------
NUM_CLASSES = 4
NUM_FILTERS = 16
KERNEL_SIZES = (1, 3, 5)
KMAX = max(KERNEL_SIZES)
EMB_DIM = 32
VOCAB = 50
PADDING_IDX = 0
BATCH = 2
SEQ = 16
SEQ_PAD = SEQ + KMAX - 1          # zero-padded so every tap slice has length SEQ
ENC_DIM = NUM_FILTERS * len(KERNEL_SIZES)
OUT_PAD = 128                     # lane-dense padded output width


# ---------------------------- Pallas kernel ----------------------------------
def textcnn_kernel(x_ref, w_ref, b_ref, vmask_ref, fcw_ref, fcb_ref, out_ref):
    # x_ref:     (BB, SEQ_PAD, E)   masked, zero-padded embeddings
    # w_ref:     (KMAX*E, 3F)       stacked / tap-zero-padded conv weights
    # b_ref:     (1, 3F)            stacked conv biases
    # vmask_ref: (SEQ, 3F)          1.0 where the time step is valid for that
    #                               filter's kernel size, else 0.0
    # fcw_ref:   (3F, OUT_PAD)      fc weight, zero-padded to 128 lanes
    # fcb_ref:   (1, OUT_PAD)
    # out_ref:   (BB, OUT_PAD)
    x = x_ref[...]
    bb = x.shape[0]

    # im2col: window[b, t] = concat_tau x[b, t + tau]  -> (BB*SEQ, KMAX*E)
    windows = jnp.concatenate(
        [x[:, tau:tau + SEQ, :] for tau in range(KMAX)], axis=-1)
    windows = windows.reshape(bb * SEQ, KMAX * EMB_DIM)

    # All 3 convs (all taps) in one MXU matmul, f32 accumulation.
    conv = jnp.dot(windows, w_ref[...], preferred_element_type=jnp.float32)
    conv = jnp.maximum(conv + b_ref[...], 0.0)            # bias + ReLU
    conv = conv.reshape(bb, SEQ, ENC_DIM) * vmask_ref[...][None]
    pooled = jnp.max(conv, axis=1)                        # (BB, 3F)

    # TODO(synk): nn.Dropout is stochastic in training; at inference it is the
    # identity, which is what we implement here.
    out_ref[...] = (jnp.dot(pooled, fcw_ref[...],
                            preferred_element_type=jnp.float32)
                    + fcb_ref[...])                       # (BB, OUT_PAD)


# ------------------------------ Wrapper ---------------------------------------
def textcnn_forward(tokens, params):
    B, S = tokens.shape
    assert S == SEQ and B == BATCH

    # Glue that stays in plain JAX (fuses into the embedding gather):
    # padding mask * embedding lookup, plus KMAX-1 zero columns of time
    # padding so every conv tap slice inside the kernel has length SEQ.
    mask = (tokens != PADDING_IDX).astype(jnp.float32)[..., None]    # (B,S,1)
    x = jnp.take(params["emb"], tokens, axis=0) * mask               # (B,S,E)
    x = jnp.pad(x, ((0, 0), (0, KMAX - 1), (0, 0)))                  # (B,S+4,E)
    # TODO(synk): at realistic B*S the gather itself could be fused into the
    # kernel (tokens via PrefetchScalarGridSpec + VMEM-resident table) to
    # avoid the HBM round trip of the embedded tensor.

    # Stack all conv weights into one (KMAX*E, 3F) matrix (taps zero-padded to
    # KMAX), biases into (1, 3F), and build the time-validity mask (SEQ, 3F).
    w_cols, b_cols, valid_cols = [], [], []
    for k in KERNEL_SIZES:
        w, bvec = params["convs"][k]                        # (F, E, k), (F,)
        w_t = jnp.transpose(w, (2, 1, 0))                   # (k, E, F)
        w_t = jnp.pad(w_t, ((0, KMAX - k), (0, 0), (0, 0))) # (KMAX, E, F)
        w_cols.append(w_t.reshape(KMAX * EMB_DIM, NUM_FILTERS))
        b_cols.append(bvec)
        valid = (jnp.arange(SEQ) < (SEQ - k + 1)).astype(jnp.float32)
        valid_cols.append(jnp.tile(valid[:, None], (1, NUM_FILTERS)))
    w_stacked = jnp.concatenate(w_cols, axis=1)                 # (KMAX*E, 3F)
    b_stacked = jnp.concatenate(b_cols).reshape(1, ENC_DIM)     # (1, 3F)
    vmask = jnp.concatenate(valid_cols, axis=1)                 # (SEQ, 3F)

    # FC weight/bias padded to a lane-dense 128-wide output.
    fcw = jnp.zeros((ENC_DIM, OUT_PAD), jnp.float32)
    fcw = fcw.at[:, :NUM_CLASSES].set(params["fc_w"].T)
    fcb = jnp.zeros((1, OUT_PAD), jnp.float32)
    fcb = fcb.at[:, :NUM_CLASSES].set(params["fc_b"])

    out_padded = pl.pallas_call(
        textcnn_kernel,
        out_shape=jax.ShapeDtypeStruct((B, OUT_PAD), jnp.float32),
        grid=(B // BATCH,),                      # single step: whole batch
        in_specs=[
            pl.BlockSpec((BATCH, SEQ_PAD, EMB_DIM), lambda b: (b, 0, 0)),
            pl.BlockSpec((KMAX * EMB_DIM, ENC_DIM), lambda b: (0, 0)),
            pl.BlockSpec((1, ENC_DIM), lambda b: (0, 0)),
            pl.BlockSpec((SEQ, ENC_DIM), lambda b: (0, 0)),
            pl.BlockSpec((ENC_DIM, OUT_PAD), lambda b: (0, 0)),
            pl.BlockSpec((1, OUT_PAD), lambda b: (0, 0)),
        ],
        out_specs=pl.BlockSpec((BATCH, OUT_PAD), lambda b: (b, 0)),
        compiler_params=pltpu.CompilerParams(
            dimension_semantics=("parallel",)),
    )(x, w_stacked, b_stacked, vmask, fcw, fcb)

    return out_padded[:, :NUM_CLASSES]


# ---------------------- Deterministic parameter init --------------------------
def init_params(key):
    keys = jax.random.split(key, 3 + 2 * len(KERNEL_SIZES))
    emb = jax.random.normal(keys[0], (VOCAB, EMB_DIM), jnp.float32) * 0.1
    emb = emb.at[PADDING_IDX].set(0.0)
    convs = {}
    for i, k in enumerate(KERNEL_SIZES):
        w = jax.random.normal(keys[1 + 2 * i],
                              (NUM_FILTERS, EMB_DIM, k), jnp.float32) * 0.1
        b = jax.random.normal(keys[2 + 2 * i],
                              (NUM_FILTERS,), jnp.float32) * 0.1
        convs[k] = (w, b)
    fc_w = jax.random.normal(keys[-2], (NUM_CLASSES, ENC_DIM), jnp.float32) * 0.1
    fc_b = jax.random.normal(keys[-1], (NUM_CLASSES,), jnp.float32) * 0.1
    return {"emb": emb, "convs": convs, "fc_w": fc_w, "fc_b": fc_b}


# ---------------------------- Pure-JAX reference -------------------------------
def reference_forward(tokens, params):
    mask = (tokens != PADDING_IDX).astype(jnp.float32)
    x = jnp.take(params["emb"], tokens, axis=0) * mask[..., None]   # (B, S, E)
    x = jnp.transpose(x, (0, 2, 1))                                 # (B, E, S) NCW
    pooled = []
    for k in KERNEL_SIZES:
        w, b = params["convs"][k]
        y = jax.lax.conv_general_dilated(
            x, w, window_strides=(1,), padding="VALID",
            dimension_numbers=("NCH", "OIH", "NCH"))                # (B, F, L)
        y = jax.nn.relu(y + b[None, :, None])
        pooled.append(jnp.max(y, axis=2))                           # (B, F)
    feat = jnp.concatenate(pooled, axis=1)                          # (B, 3F)
    return feat @ params["fc_w"].T + params["fc_b"]                 # (B, C)


if __name__ == "__main__":
    key = jax.random.PRNGKey(0)
    pkey, tkey = jax.random.split(key)
    params = init_params(pkey)

    tokens = jax.random.randint(tkey, (BATCH, SEQ), 0, VOCAB)
    tokens = tokens.at[:, -3:].set(PADDING_IDX)   # exercise the padding mask

    out = jax.block_until_ready(textcnn_forward(tokens, params))
    ref = reference_forward(tokens, params)

    assert out.shape == (BATCH, NUM_CLASSES), out.shape
    assert jnp.allclose(out, ref, atol=1e-4, rtol=1e-4), (out, ref)
    print("KERNEL_OK")
</pallas_src>

<mosaic_0001>
module attributes {stable_mosaic.version = 11 : i64} {
  func.func @textcnn_kernel(%arg0: i32, %arg1: memref<2x20x32xf32, #tpu.memory_space<vmem>>, %arg2: memref<160x48xf32, #tpu.memory_space<vmem>>, %arg3: memref<1x48xf32, #tpu.memory_space<vmem>>, %arg4: memref<16x48xf32, #tpu.memory_space<vmem>>, %arg5: memref<48x128xf32, #tpu.memory_space<vmem>>, %arg6: memref<1x128xf32, #tpu.memory_space<vmem>>, %arg7: memref<2x128xf32, #tpu.memory_space<vmem>>) attributes {dimension_semantics = [#tpu.dimension_semantics<parallel>], iteration_bounds = array<i64: 1>, scalar_prefetch = 0 : i64, scratch_operands = 0 : i64, tpu.core_type = #tpu.core_type<tc>, window_params = [{transform_indices = @transform_0, window_bounds = array<i64: 2, 20, 32>}, {pipeline_mode = #tpu.pipeline_mode<synchronous>, transform_indices = @transform_1, window_bounds = array<i64: 160, 48>}, {pipeline_mode = #tpu.pipeline_mode<synchronous>, transform_indices = @transform_2, window_bounds = array<i64: 1, 48>}, {pipeline_mode = #tpu.pipeline_mode<synchronous>, transform_indices = @transform_3, window_bounds = array<i64: 16, 48>}, {pipeline_mode = #tpu.pipeline_mode<synchronous>, transform_indices = @transform_4, window_bounds = array<i64: 48, 128>}, {pipeline_mode = #tpu.pipeline_mode<synchronous>, transform_indices = @transform_5, window_bounds = array<i64: 1, 128>}, {transform_indices = @transform_6, window_bounds = array<i64: 2, 128>}]} {
    %c0 = arith.constant 0 : index
    %c0_0 = arith.constant 0 : index
    %c0_1 = arith.constant 0 : index
    %0 = vector.load %arg1[%c0, %c0_0, %c0_1] : memref<2x20x32xf32, #tpu.memory_space<vmem>>, vector<2x20x32xf32>
    %1 = vector.extract_strided_slice %0 {offsets = [0, 0, 0], sizes = [2, 16, 32], strides = [1, 1, 1]} : vector<2x20x32xf32> to vector<2x16x32xf32>
    %2 = vector.extract_strided_slice %0 {offsets = [0, 1, 0], sizes = [2, 16, 32], strides = [1, 1, 1]} : vector<2x20x32xf32> to vector<2x16x32xf32>
    %3 = vector.extract_strided_slice %0 {offsets = [0, 2, 0], sizes = [2, 16, 32], strides = [1, 1, 1]} : vector<2x20x32xf32> to vector<2x16x32xf32>
    %4 = vector.extract_strided_slice %0 {offsets = [0, 3, 0], sizes = [2, 16, 32], strides = [1, 1, 1]} : vector<2x20x32xf32> to vector<2x16x32xf32>
    %5 = vector.extract_strided_slice %0 {offsets = [0, 4, 0], sizes = [2, 16, 32], strides = [1, 1, 1]} : vector<2x20x32xf32> to vector<2x16x32xf32>
    %6 = tpu.concatenate %1, %2, %3, %4, %5 in 2 : vector<2x16x32xf32>, vector<2x16x32xf32>, vector<2x16x32xf32>, vector<2x16x32xf32>, vector<2x16x32xf32> -> vector<2x16x160xf32>
    %7 = vector.shape_cast %6 : vector<2x16x160xf32> to vector<32x160xf32>
    %c0_2 = arith.constant 0 : index
    %c0_3 = arith.constant 0 : index
    %8 = vector.load %arg2[%c0_2, %c0_3] : memref<160x48xf32, #tpu.memory_space<vmem>>, vector<160x48xf32>
    %cst = arith.constant dense<0.000000e+00> : vector<32x48xf32>
    %9 = tpu.matmul %7, %8, %cst {dimension_numbers = #tpu.dot_dimension_numbers<[1], [0], [0], [1], [0, 0, 1, 1], [], []>} : vector<32x160xf32>, vector<160x48xf32>, vector<32x48xf32> -> vector<32x48xf32>
    %c0_4 = arith.constant 0 : index
    %c0_5 = arith.constant 0 : index
    %10 = vector.load %arg3[%c0_4, %c0_5] : memref<1x48xf32, #tpu.memory_space<vmem>>, vector<1x48xf32>
    %11 = vector.broadcast %10 : vector<1x48xf32> to vector<32x48xf32>
    %12 = arith.addf %9, %11 : vector<32x48xf32>
    %cst_6 = arith.constant 0.000000e+00 : f32
    %13 = vector.broadcast %cst_6 : f32 to vector<32x48xf32>
    %14 = arith.maximumf %12, %13 : vector<32x48xf32>
    %15 = vector.shape_cast %14 : vector<32x48xf32> to vector<2x16x48xf32>
    %c0_7 = arith.constant 0 : index
    %c0_8 = arith.constant 0 : index
    %16 = vector.load %arg4[%c0_7, %c0_8] : memref<16x48xf32, #tpu.memory_space<vmem>>, vector<16x48xf32>
    %17 = vector.shape_cast %16 : vector<16x48xf32> to vector<1x16x48xf32>
    %18 = vector.broadcast %17 : vector<1x16x48xf32> to vector<2x16x48xf32>
    %19 = arith.mulf %15, %18 : vector<2x16x48xf32>
    %cst_9 = arith.constant dense<0xFF800000> : vector<2x48xf32>
    %20 = vector.multi_reduction <maximumf>, %19, %cst_9 [1] : vector<2x16x48xf32> to vector<2x48xf32>
    %c0_10 = arith.constant 0 : index
    %c0_11 = arith.constant 0 : index
    %21 = vector.load %arg5[%c0_10, %c0_11] : memref<48x128xf32, #tpu.memory_space<vmem>>, vector<48x128xf32>
    %cst_12 = arith.constant dense<0.000000e+00> : vector<2x128xf32>
    %22 = tpu.matmul %20, %21, %cst_12 {dimension_numbers = #tpu.dot_dimension_numbers<[1], [0], [0], [1], [0, 0, 1, 1], [], []>} : vector<2x48xf32>, vector<48x128xf32>, vector<2x128xf32> -> vector<2x128xf32>
    %c0_13 = arith.constant 0 : index
    %c0_14 = arith.constant 0 : index
    %23 = vector.load %arg6[%c0_13, %c0_14] : memref<1x128xf32, #tpu.memory_space<vmem>>, vector<1x128xf32>
    %24 = vector.broadcast %23 : vector<1x128xf32> to vector<2x128xf32>
    %25 = arith.addf %22, %24 : vector<2x128xf32>
    %c0_15 = arith.constant 0 : index
    %c0_16 = arith.constant 0 : index
    %26 = vector.load %arg7[%c0_15, %c0_16] : memref<2x128xf32, #tpu.memory_space<vmem>>, vector<2x128xf32>
    tpu.vector_store %arg7[%c0_15, %c0_16], %25 {strides = array<i32>} : memref<2x128xf32, #tpu.memory_space<vmem>>, vector<2x128xf32>,
    return
  }
  func.func @transform_0(%arg0: i32) -> (i32, i32, i32) {
    %c0_i32 = arith.constant 0 : i32
    %c0_i32_0 = arith.constant 0 : i32
    %c0_i32_1 = arith.constant 0 : i32
    return %arg0, %c0_i32, %c0_i32_0 : i32, i32, i32
  }
  func.func @transform_1(%arg0: i32) -> (i32, i32) {
    %c0_i32 = arith.constant 0 : i32
    %c0_i32_0 = arith.constant 0 : i32
    %c0_i32_1 = arith.constant 0 : i32
    return %c0_i32, %c0_i32_0 : i32, i32
  }
  func.func @transform_2(%arg0: i32) -> (i32, i32) {
    %c0_i32 = arith.constant 0 : i32
    %c0_i32_0 = arith.constant 0 : i32
    %c0_i32_1 = arith.constant 0 : i32
    return %c0_i32, %c0_i32_0 : i32, i32
  }
  func.func @transform_3(%arg0: i32) -> (i32, i32) {
    %c0_i32 = arith.constant 0 : i32
    %c0_i32_0 = arith.constant 0 : i32
    %c0_i32_1 = arith.constant 0 : i32
    return %c0_i32, %c0_i32_0 : i32, i32
  }
  func.func @transform_4(%arg0: i32) -> (i32, i32) {
    %c0_i32 = arith.constant 0 : i32
    %c0_i32_0 = arith.constant 0 : i32
    %c0_i32_1 = arith.constant 0 : i32
    return %c0_i32, %c0_i32_0 : i32, i32
  }
  func.func @transform_5(%arg0: i32) -> (i32, i32) {
    %c0_i32 = arith.constant 0 : i32
    %c0_i32_0 = arith.constant 0 : i32
    %c0_i32_1 = arith.constant 0 : i32
    return %c0_i32, %c0_i32_0 : i32, i32
  }
  func.func @transform_6(%arg0: i32) -> (i32, i32) {
    %c0_i32 = arith.constant 0 : i32
    %c0_i32_0 = arith.constant 0 : i32
    return %arg0, %c0_i32 : i32, i32
  }
}

</mosaic_0001>

<llo_original>
// kernel: tpu_custom_call.1
$region0: #{tpu_custom_call.1}
  #allocation0 [shape = 'u32[]', space=smem, size = 0x4, offset = 0x4, fixed_abs, tag = 'smem constant byte address 0x4 - core index']
  #allocation1 [shape = 'u32[72,128]{1,0:T(1,128)}', space=vmem, size = 0x9000, scoped, tag = 'internal scratch']
  %s0 = inlined_call_operand.vmem [shape: f32[2,20,32], index: 0, kind: input, shape index: {}]
  %s1 = inlined_call_operand.vmem [shape: f32[160,48], index: 1, kind: input, shape index: {}]
  %s2 = inlined_call_operand.vmem [shape: f32[1,48], index: 2, kind: input, shape index: {}]
  %s3 = inlined_call_operand.vmem [shape: f32[16,48], index: 3, kind: input, shape index: {}]
  %s4 = inlined_call_operand.vmem [shape: f32[48,128], index: 4, kind: input, shape index: {}]
  %s5 = inlined_call_operand.vmem [shape: f32[1,128], index: 5, kind: input, shape index: {}]
  %s6 = inlined_call_operand.hbm [shape: f32[2,128], index: 6, kind: output, shape index: {}]
  %s7 = sld [smem:[#allocation0]]
  $region34: #{tpu_custom_call.1} parent=0
    _
  %s9 = ssub.s32 1, %s7
  %s10 = scalar_select 0, %s9, %s7
  $region1: #{tpu_custom_call.1} parent=0
    #allocation2 [shape = 'u8[1024]{0}', space=vmem, size = 0x400, scoped, tag = 'output window, operand 0, single buffered']
    #allocation3 [shape = 's32[1]{0}', space=sflag, size = 0x4, scoped, tag = 'scoped memory for tpu_custom_call.1']
    %11 = vsyncpa [#allocation3], 0
    // Predicated region
    $region2: #{tpu_custom_call.1} parent=1 // pred_check
      _
    $region3: #{tpu_custom_call.1} parent=1 // pred_check_branch
      %13 = sbr.rel (0) target = $region5
    $region4: #{tpu_custom_call.1} parent=1 // pred_region
      _
    $region5: #{tpu_custom_call.1} parent=1 // pred_fallthru
      _
    // Predicated region
    $region6: #{tpu_custom_call.1} parent=1 // pred_check
      _
    $region7: #{tpu_custom_call.1} parent=1 // pred_check_branch
      %15 = sbr.rel (0) target = $region9
    $region8: #{tpu_custom_call.1} parent=1 // pred_region
      _
    $region9: #{tpu_custom_call.1} parent=1 // pred_fallthru
      _
    // Predicated region
    $region10: #{tpu_custom_call.1} parent=1 // pred_check
      _
    $region11: #{tpu_custom_call.1} parent=1 // pred_check_branch
      %17 = sbr.rel (0) target = $region13
    $region12: #{tpu_custom_call.1} parent=1 // pred_region
      _
    $region13: #{tpu_custom_call.1} parent=1 // pred_fallthru
      _
    // Predicated region
    $region14: #{tpu_custom_call.1} parent=1 // pred_check
      _
    $region15: #{tpu_custom_call.1} parent=1 // pred_check_branch
      %19 = sbr.rel (0) target = $region17
    $region16: #{tpu_custom_call.1} parent=1 // pred_region
      _
    $region17: #{tpu_custom_call.1} parent=1 // pred_fallthru
      _
    // Predicated region
    $region18: #{tpu_custom_call.1} parent=1 // pred_check
      _
    $region19: #{tpu_custom_call.1} parent=1 // pred_check_branch
      %21 = sbr.rel (0) target = $region21
    $region20: #{tpu_custom_call.1} parent=1 // pred_region
      _
    $region21: #{tpu_custom_call.1} parent=1 // pred_fallthru
      _
    // Predicated region
    $region22: #{tpu_custom_call.1} parent=1 // pred_check
      _
    $region23: #{tpu_custom_call.1} parent=1 // pred_check_branch
      %23 = sbr.rel (0) target = $region25
    $region24: #{tpu_custom_call.1} parent=1 // pred_region
      _
    $region25: #{tpu_custom_call.1} parent=1 // pred_fallthru
      _
    %v24 = vld [vmem:[%s0] sm:$0xff]
    %v25 = vld [vmem:[%s0 + $0x8] sm:$0xff]
    %v26 = vld [vmem:[%s0 + $0x10] sm:$0xf]
    %v27 = vld [vmem:[%s0 + $0x18] sm:$0xff]
    %v28 = vld [vmem:[%s0 + $0x20] sm:$0xff]
    %v29 = vld [vmem:[%s0 + $0x28] sm:$0xf]
    %vm36 = vcmask 1046528
    %v37 = vrot.slane %v24, 1
    %v38 = vrot.slane %v25, 1
    %v39 = vsel %vm36, %v37, %v38
    %v40 = vrot.slane %v26, 1
    %v41 = vsel %vm36, %v38, %v40
    %v42 = vrot.slane %v27, 1
    %v43 = vrot.slane %v28, 1
    %v44 = vsel %vm36, %v42, %v43
    %v45 = vrot.slane %v29, 1
    %v46 = vsel %vm36, %v43, %v45
    %47 = vrot.lane.b32.xlu0 %v39, 32
    %v48 = vpop.permute.xlu0 %47
    %49 = vrot.lane.b32.xlu0 %v41, 32
    %v50 = vpop.permute.xlu0 %49
    %51 = vrot.lane.b32.xlu0 %v44, 32
    %v52 = vpop.permute.xlu0 %51
    %53 = vrot.lane.b32.xlu0 %v46, 32
    %v54 = vpop.permute.xlu0 %53
    %vm59 = vcmask 1045504
    %v60 = vrot.slane %v24, 2
    %v61 = vrot.slane %v25, 2
    %v62 = vsel %vm59, %v60, %v61
    %v63 = vrot.slane %v26, 2
    %v64 = vsel %vm59, %v61, %v63
    %v65 = vrot.slane %v27, 2
    %v66 = vrot.slane %v28, 2
    %v67 = vsel %vm59, %v65, %v66
    %v68 = vrot.slane %v29, 2
    %v69 = vsel %vm59, %v66, %v68
    %70 = vrot.lane.b32.xlu0 %v62, 64
    %v71 = vpop.permute.xlu0 %70
    %72 = vrot.lane.b32.xlu0 %v64, 64
    %v73 = vpop.permute.xlu0 %72
    %74 = vrot.lane.b32.xlu0 %v67, 64
    %v75 = vpop.permute.xlu0 %74
    %76 = vrot.lane.b32.xlu0 %v69, 64
    %v77 = vpop.permute.xlu0 %76
    %vm82 = vcmask 1044480
    %v83 = vrot.slane %v24, 3
    %v84 = vrot.slane %v25, 3
    %v85 = vsel %vm82, %v83, %v84
    %v86 = vrot.slane %v26, 3
    %v87 = vsel %vm82, %v84, %v86
    %v88 = vrot.slane %v27, 3
    %v89 = vrot.slane %v28, 3
    %v90 = vsel %vm82, %v88, %v89
    %v91 = vrot.slane %v29, 3
    %v92 = vsel %vm82, %v89, %v91
    %93 = vrot.lane.b32.xlu0 %v85, 96
    %v94 = vpop.permute.xlu0 %93
    %95 = vrot.lane.b32.xlu0 %v87, 96
    %v96 = vpop.permute.xlu0 %95
    %97 = vrot.lane.b32.xlu0 %v90, 96
    %v98 = vpop.permute.xlu0 %97
    %99 = vrot.lane.b32.xlu0 %v92, 96
    %v100 = vpop.permute.xlu0 %99
    %vm105 = vcmask 1043456
    %v106 = vrot.slane %v24, 4
    %v107 = vrot.slane %v25, 4
    %v108 = vsel %vm105, %v106, %v107
    %v109 = vrot.slane %v26, 4
    %v110 = vsel %vm105, %v107, %v109
    %v111 = vrot.slane %v27, 4
    %v112 = vrot.slane %v28, 4
    %v113 = vsel %vm105, %v111, %v112
    %v114 = vrot.slane %v29, 4
    %v115 = vsel %vm105, %v112, %v114
    %vm116 = vcmask 261120
    %v117 = vsel %vm116, %v24, %v48
    %v118 = vsel %vm116, %v25, %v50
    %v119 = vsel %vm116, %v27, %v52
    %v120 = vsel %vm116, %v28, %v54
    %vm121 = vcmask 523264
    %v122 = vsel %vm121, %v117, %v71
    %v123 = vsel %vm121, %v118, %v73
    %v124 = vsel %vm121, %v119, %v75
    %v125 = vsel %vm121, %v120, %v77
    %vm126 = vcmask 785408
    %v127 = vsel %vm126, %v122, %v94
    %v128 = vsel %vm126, %v123, %v96
    %v129 = vsel %vm126, %v124, %v98
    %v130 = vsel %vm126, %v125, %v100
    %v131 = vld [vmem:[%s1] sm:$0xff]
    %v132 = vld [vmem:[%s1 + $0x8] sm:$0xff]
    %v133 = vld [vmem:[%s1 + $0x10] sm:$0xff]
    %v134 = vld [vmem:[%s1 + $0x18] sm:$0xff]
    %v135 = vld [vmem:[%s1 + $0x20] sm:$0xff]
    %v136 = vld [vmem:[%s1 + $0x28] sm:$0xff]
    %v137 = vld [vmem:[%s1 + $0x30] sm:$0xff]
    %v138 = vld [vmem:[%s1 + $0x38] sm:$0xff]
    %v139 = vld [vmem:[%s1 + $0x40] sm:$0xff]
    %v140 = vld [vmem:[%s1 + $0x48] sm:$0xff]
    %v141 = vld [vmem:[%s1 + $0x50] sm:$0xff]
    %v142 = vld [vmem:[%s1 + $0x58] sm:$0xff]
    %v143 = vld [vmem:[%s1 + $0x60] sm:$0xff]
    %v144 = vld [vmem:[%s1 + $0x68] sm:$0xff]
    %v145 = vld [vmem:[%s1 + $0x70] sm:$0xff]
    %v146 = vld [vmem:[%s1 + $0x78] sm:$0xff]
    %v147 = vld [vmem:[%s1 + $0x80] sm:$0xff]
    %v148 = vld [vmem:[%s1 + $0x88] sm:$0xff]
    %v149 = vld [vmem:[%s1 + $0x90] sm:$0xff]
    %v150 = vld [vmem:[%s1 + $0x98] sm:$0xff]
    %v151 = vld [vmem:[%s2] sm:$0x1]
    %v153 = vperm.slane %v151, 0
    %v155 = vsel %vm116, %v108, 0
    %v157 = vsel %vm116, %v110, 0
    %v159 = vsel %vm116, %v113, 0
    %v161 = vsel %vm116, %v115, 0
    %163 = vmatpush.msra.mxu0 %v146
    %164 = vmatpush.msra.mxu0 %v145
    %165 = vmatpush.msra.mxu0 %v144
    %166 = vmatpush.msra.mxu0 %v143
    %167 = vmatpush.msra.mxu0 %v142
    %168 = vmatpush.msra.mxu0 %v141
    %169 = vmatpush.msra.mxu0 %v140
    %170 = vmatpush.msra.mxu0 %v139
    %171 = vmatpush.msra.mxu0 %v138
    %172 = vmatpush.msra.mxu0 %v137
    %173 = vmatpush.msra.mxu0 %v136
    %174 = vmatpush.msra.mxu0 %v135
    %175 = vmatpush.msra.mxu0 %v134
    %176 = vmatpush.msra.mxu0 %v133
    %177 = vmatpush.msra.mxu0 %v132
    %178 = vmatpush.msra.mxu0 %v131
    %179 = vmatmul.f32.gmra.mxu0 %v127
    %v180 = vpop.f32.mrf.mxu0
    %v181 = vadd.f32 %v153, %v180
    %182 = vmatmul.f32.gmra.mxu0 %v128
    %v183 = vpop.f32.mrf.mxu0
    %v184 = vadd.f32 %v153, %v183
    %185 = vmatmul.f32.gmra.mxu0 %v129
    %v186 = vpop.f32.mrf.mxu0
    %v187 = vadd.f32 %v153, %v186
    %188 = vmatmul.f32.gmra.mxu0 %v130
    %v189 = vpop.f32.mrf.mxu0
    %v190 = vadd.f32 %v153, %v189
    %191 = vdwg.mxu0
    %192 = vmatpush.msra.mxu0 0.0
    %193 = vmatpush.msra.mxu0 0.0
    %194 = vmatpush.msra.mxu0 0.0
    %195 = vmatpush.msra.mxu0 0.0
    %196 = vmatpush.msra.mxu0 0.0
    %197 = vmatpush.msra.mxu0 0.0
    %198 = vmatpush.msra.mxu0 0.0
    %199 = vmatpush.msra.mxu0 0.0
    %200 = vmatpush.msra.mxu0 0.0
    %201 = vmatpush.msra.mxu0 0.0
    %202 = vmatpush.msra.mxu0 0.0
    %203 = vmatpush.msra.mxu0 0.0
    %204 = vmatpush.msra.mxu0 %v150
    %205 = vmatpush.msra.mxu0 %v149
    %206 = vmatpush.msra.mxu0 %v148
    %207 = vmatpush.msra.mxu0 %v147
    %208 = vmatmul.f32.gmra.mxu0 %v155
    %v209 = vpop.f32.mrf.mxu0
    %v210 = vadd.f32 %v181, %v209
    %211 = vmatmul.f32.gmra.mxu0 %v157
    %v212 = vpop.f32.mrf.mxu0
    %v213 = vadd.f32 %v184, %v212
    %214 = vmatmul.f32.gmra.mxu0 %v159
    %v215 = vpop.f32.mrf.mxu0
    %v216 = vadd.f32 %v187, %v215
    %217 = vmatmul.f32.gmra.mxu0 %v161
    %v218 = vpop.f32.mrf.mxu0
    %v219 = vadd.f32 %v190, %v218
    %220 = vdwg.mxu0
    %v221 = vmax.f32 %v210, 0.0
    %v222 = vmax.f32 %v213, 0.0
    %v223 = vmax.f32 %v216, 0.0
    %v224 = vmax.f32 %v219, 0.0
    %v225 = vld [vmem:[%s3] sm:$0xff]
    %v226 = vld [vmem:[%s3 + $0x8] sm:$0xff]
    %v227 = vmul.f32 %v221, %v225
    %v228 = vmul.f32 %v222, %v226
    %v229 = vmul.f32 %v223, %v225
    %v230 = vmul.f32 %v224, %v226
    %vm231 = vcmask 392192
    %v232 = vsel %vm231, %v227, -inf
    %v233 = vsel %vm231, %v228, -inf
    %v234 = vmax.f32 %v232, %v233
    %v235 = vrot.slane %v234, 4
    %v236 = vmax.f32 %v234, %v235
    %v237 = vrot.slane %v236, 2
    %v238 = vmax.f32 %v236, %v237
    %v239 = vrot.slane %v238, 1
    %v240 = vmax.f32 %v238, %v239
    %v241 = vsel %vm231, %v229, -inf
    %v242 = vsel %vm231, %v230, -inf
    %v243 = vmax.f32 %v241, %v242
    %v244 = vrot.slane %v243, 4
    %v245 = vmax.f32 %v243, %v244
    %v246 = vrot.slane %v245, 2
    %v247 = vmax.f32 %v245, %v246
    %v248 = vrot.slane %v247, 1
    %v249 = vmax.f32 %v247, %v248
    %v250 = vld [vmem:[%s4] sm:$0xff]
    %v251 = vld [vmem:[%s4 + $0x8] sm:$0xff]
    %v252 = vld [vmem:[%s4 + $0x10] sm:$0xff]
    %v253 = vld [vmem:[%s4 + $0x18] sm:$0xff]
    %v254 = vld [vmem:[%s4 + $0x20] sm:$0xff]
    %v255 = vld [vmem:[%s4 + $0x28] sm:$0xff]
    %v256 = vld [vmem:[%s5] sm:$0x1]
    %v258 = vperm.slane %v256, 0
    %vm262 = vcmask 1041409
    %v263 = vsel %vm262, %v249, %v240
    %v264 = vsel %vm231, %v263, 0
    %266 = vmatpush.msra.mxu0 0.0
    %267 = vmatpush.msra.mxu0 0.0
    %268 = vmatpush.msra.mxu0 0.0
    %269 = vmatpush.msra.mxu0 0.0
    %270 = vmatpush.msra.mxu0 0.0
    %271 = vmatpush.msra.mxu0 0.0
    %272 = vmatpush.msra.mxu0 0.0
    %273 = vmatpush.msra.mxu0 0.0
    %274 = vmatpush.msra.mxu0 0.0
    %275 = vmatpush.msra.mxu0 0.0
    %276 = vmatpush.msra.mxu0 %v255
    %277 = vmatpush.msra.mxu0 %v254
    %278 = vmatpush.msra.mxu0 %v253
    %279 = vmatpush.msra.mxu0 %v252
    %280 = vmatpush.msra.mxu0 %v251
    %281 = vmatpush.msra.mxu0 %v250
    %282 = vmatmul.f32.gmra.mxu0 %v264
    %v283 = vpop.f32.mrf.mxu0
    %v284 = vadd.f32 %v258, %v283
    %285 = vdwg.mxu0
    %286 = vst [vmem:[#allocation2] sm:$0x3] %v284
    // Predicated region
    $region26: #{tpu_custom_call.1} parent=1 // pred_check
      _
    $region27: #{tpu_custom_call.1} parent=1 // pred_check_branch
      %288 = sbr.rel (0) target = $region29
    $region28: #{tpu_custom_call.1} parent=1 // pred_region
      %290 = vsyncadd [#allocation3], 0
      %s292 = sshll.u32 [#allocation2], 4
      %s293 = int_to_ptr.vmem [resolvable:$true] %s292
      %s294 = sshll.u32 %s6, 4
      %s295 = int_to_ptr.hbm [resolvable:$true] %s294
      %297 = dma.vmem_to_hbm [thread:$0]  %s293, 32, %s295, [#allocation3]
    $region29: #{tpu_custom_call.1} parent=1 // pred_fallthru
      _
    // Predicated region
    $region30: #{tpu_custom_call.1} parent=1 // pred_check
      _
    $region31: #{tpu_custom_call.1} parent=1 // pred_check_branch
      %299 = sbr.rel (0) target = $region33
    $region32: #{tpu_custom_call.1} parent=1 // pred_region
      %301 = dma.done [#allocation3], 32
    $region33: #{tpu_custom_call.1} parent=1 // pred_fallthru
      _
    %302 = vsyncpa [#allocation3], 1

</llo_original>
